<compile_context>
chip_gen: v6e
topology: v6e:2x2x1
jax: 0.10.0
libtpu: 0.0.40
codegen_flags: <defaults>
</compile_context>

<pallas_src>
import functools
import math

import jax
import jax.numpy as jnp
from jax import lax
from jax.experimental import pallas as pl
from jax.experimental.pallas import tpu as pltpu

ALPHA = 0.5          # default alpha of the PyTorch module
REDUCTION = "mean"   # default reduction of the PyTorch module

# Lane widths tried in order of preference (must divide N for the zero-copy path).
_LANE_CANDIDATES = (1024, 512, 896, 768, 640, 384, 256, 128)
# ~2 MiB f32 per input block; 2 inputs x 2 pipeline buffers + (8, lane) accumulators
# stays well under the 16 MiB default scoped VMEM even on v5e.
_MAX_BLOCK_ELEMS = 512 * 1024


def _si_depth_kernel(out_ref, lab_ref, loss_ref, acc_s, acc_s2, *,
                     alpha: float, n_valid: int, n_rows: int, tr: int, lane: int,
                     needs_mask: bool, fold: bool):
    """Grid = (B, num_row_tiles). Input blocks (1, TR, LANE); scratch (8|TR, LANE) f32."""
    k = pl.program_id(1)

    @pl.when(k == 0)
    def _init():
        acc_s[...] = jnp.zeros_like(acc_s)
        acc_s2[...] = jnp.zeros_like(acc_s2)

    x = out_ref[0].astype(jnp.float32)            # (TR, LANE)
    y = lab_ref[0].astype(jnp.float32)
    d = x - jnp.log(y)

    if needs_mask:
        # Ragged last row-block: rows beyond n_rows contain garbage (possibly NaN after
        # the log) -> select 0 via jnp.where so it can never corrupt the sums.
        row = lax.broadcasted_iota(jnp.int32, (tr, lane), 0)
        d = jnp.where(k * tr + row < n_rows, d, jnp.float32(0.0))

    d2 = d * d
    if fold:
        # Fold sublane groups of 8 into the small (8, LANE) accumulators. The reshape
        # splits only the sublane axis (tile-boundary aligned -> free); the adds are
        # plain vreg adds on the VPU, and the accumulator RMW touches only 8 rows.
        acc_s[...] = acc_s[...] + jnp.sum(d.reshape(tr // 8, 8, lane), axis=0)
        acc_s2[...] = acc_s2[...] + jnp.sum(d2.reshape(tr // 8, 8, lane), axis=0)
    else:
        acc_s[...] = acc_s[...] + d
        acc_s2[...] = acc_s2[...] + d2

    @pl.when(k == pl.num_programs(1) - 1)
    def _finalize():
        # One-shot cross-sublane + cross-lane (XLU) reduction in the epilogue only.
        s = jnp.sum(jnp.sum(acc_s[...], axis=0, keepdims=True), axis=1, keepdims=True)
        s2 = jnp.sum(jnp.sum(acc_s2[...], axis=0, keepdims=True), axis=1, keepdims=True)
        inv_n = jnp.float32(1.0 / n_valid)
        mse = s2 * inv_n                          # mean(d^2) over the true N
        rel = (s * inv_n) * (s * inv_n)           # sum(d)^2 / N^2
        loss_ref[...] = (mse - jnp.float32(alpha) * rel).reshape(1, 1, 1)


def _choose_tiling(n: int, max_block_elems: int):
    """Return (lane, rows, row_tile, n_pad) for a per-sample element count n."""
    lane = None
    for cand in _LANE_CANDIDATES:
        if n % cand == 0:
            if n // cand >= 8:                    # sublane-dense: prefer rows >= 8
                lane = cand
                break
            if lane is None:
                lane = cand                       # tiny n: keep the widest divisor
    if lane is not None:
        n_pad = 0
    else:
        # Rare fallback: n has no multiple-of-128 divisor -> minimal pad to one lane row.
        lane = 512 if n >= 8 * 512 else 128
        n_pad = (-n) % lane
    rows = (n + n_pad) // lane
    # Row tile: whole sample in one block when it fits the budget, otherwise a large
    # multiple-of-8 tile; a ragged last block is masked inside the kernel.
    max_tr = max(8, (max_block_elems // lane) // 8 * 8)
    tr = rows if rows <= max_tr else max_tr
    return lane, rows, tr, n_pad


def scale_invariant_depth_loss(outputs: jax.Array, labels: jax.Array,
                               alpha: float = ALPHA,
                               reduction: str = REDUCTION,
                               *, max_block_elems: int = _MAX_BLOCK_ELEMS) -> jax.Array:
    """outputs, labels: (B, C, H, W). Matches ScaleInvariantDepthLoss.forward."""
    assert outputs.shape == labels.shape
    assert reduction in ("none", "mean", "sum")
    bsz = outputs.shape[0]
    n = math.prod(outputs.shape[1:])

    lane, rows, tr, n_pad = _choose_tiling(n, max_block_elems)

    # Stream in native dtype; cast to f32 happens inside the kernel.
    out2d = outputs.reshape(bsz, n)
    lab2d = labels.reshape(bsz, n)
    if n_pad:
        # Fallback only (no multiple-of-128 divisor). Labels padded with 1.0 so the
        # padded elements contribute d = 0 - log(1) = 0 to the sums.
        out2d = jnp.pad(out2d, ((0, 0), (0, n_pad)))
        lab2d = jnp.pad(lab2d, ((0, 0), (0, n_pad)), constant_values=1.0)
    out3d = out2d.reshape(bsz, rows, lane)
    lab3d = lab2d.reshape(bsz, rows, lane)

    grid_k = -(-rows // tr)
    needs_mask = (rows % tr) != 0
    fold = (tr % 8) == 0
    acc_rows = 8 if fold else tr

    kernel = functools.partial(
        _si_depth_kernel, alpha=float(alpha), n_valid=int(n), n_rows=int(rows),
        tr=int(tr), lane=int(lane), needs_mask=bool(needs_mask), fold=bool(fold))

    bytes_per_el = out3d.dtype.itemsize + lab3d.dtype.itemsize
    cost = pl.CostEstimate(
        flops=5 * bsz * rows * lane,
        transcendentals=bsz * rows * lane,
        bytes_accessed=bsz * rows * lane * bytes_per_el + 4 * bsz,
    )

    per_sample = pl.pallas_call(
        kernel,
        out_shape=jax.ShapeDtypeStruct((bsz, 1, 1), jnp.float32),
        grid_spec=pltpu.PrefetchScalarGridSpec(
            num_scalar_prefetch=0,
            grid=(bsz, grid_k),
            in_specs=[
                pl.BlockSpec((1, tr, lane), lambda b, k: (b, k, 0)),
                pl.BlockSpec((1, tr, lane), lambda b, k: (b, k, 0)),
            ],
            out_specs=pl.BlockSpec((1, 1, 1), lambda b, k: (b, 0, 0)),
            scratch_shapes=[
                pltpu.VMEM((acc_rows, lane), jnp.float32),
                pltpu.VMEM((acc_rows, lane), jnp.float32),
            ],
        ),
        compiler_params=pltpu.CompilerParams(
            dimension_semantics=("parallel", "arbitrary")),
        cost_estimate=cost,
    )(out3d, lab3d)

    per_sample = per_sample.reshape(bsz)
    if reduction == "none":
        return per_sample
    if reduction == "sum":
        return jnp.sum(per_sample)
    return jnp.mean(per_sample)


def _reference_loss(outputs, labels, alpha=ALPHA, reduction=REDUCTION):
    # Pure-JAX reference mirroring the PyTorch forward.
    b = outputs.shape[0]
    d = (outputs.astype(jnp.float32) - jnp.log(labels.astype(jnp.float32))).reshape(b, -1)
    mse = jnp.mean(d ** 2, axis=-1)
    relative = jnp.sum(d, axis=-1) ** 2 / (d.shape[1] ** 2)
    batch_loss = mse - alpha * relative
    if reduction == "none":
        return batch_loss
    if reduction == "sum":
        return jnp.sum(batch_loss)
    return jnp.mean(batch_loss)


if __name__ == "__main__":
    key = jax.random.PRNGKey(0)
    k1, k2, k3, k4, k5, k6 = jax.random.split(key, 6)

    # Primary check: lane-aligned shape -> zero-copy path, single block per sample.
    B, C, H, W = 2, 4, 16, 16
    outputs = jax.random.normal(k1, (B, C, H, W), dtype=jnp.float32)
    labels = jax.random.uniform(k2, (B, C, H, W), dtype=jnp.float32,
                                minval=0.1, maxval=10.0)
    loss = jax.block_until_ready(scale_invariant_depth_loss(outputs, labels))
    ref = jax.block_until_ready(_reference_loss(outputs, labels))
    assert jnp.allclose(loss, ref, rtol=1e-5, atol=1e-5), (loss, ref)

    # Fallback check: N with no multiple-of-128 divisor -> minimal-pad path.
    out_b = jax.random.normal(k3, (2, 1, 10, 13), dtype=jnp.float32)
    lab_b = jax.random.uniform(k4, (2, 1, 10, 13), dtype=jnp.float32,
                               minval=0.1, maxval=10.0)
    loss_b = jax.block_until_ready(
        scale_invariant_depth_loss(out_b, lab_b, reduction="none"))
    ref_b = jax.block_until_ready(_reference_loss(out_b, lab_b, reduction="none"))
    assert jnp.allclose(loss_b, ref_b, rtol=1e-5, atol=1e-5), (loss_b, ref_b)

    # Multi-tile + ragged-last-block check (small block budget forces the mask path).
    out_c = jax.random.normal(k5, (2, 1, 12, 128), dtype=jnp.float32)
    lab_c = jax.random.uniform(k6, (2, 1, 12, 128), dtype=jnp.float32,
                               minval=0.1, maxval=10.0)
    loss_c = jax.block_until_ready(
        scale_invariant_depth_loss(out_c, lab_c, reduction="sum",
                                   max_block_elems=8 * 128))
    ref_c = jax.block_until_ready(_reference_loss(out_c, lab_c, reduction="sum"))
    assert jnp.allclose(loss_c, ref_c, rtol=1e-5, atol=1e-5), (loss_c, ref_c)

    print("KERNEL_OK")
</pallas_src>

<mosaic_0001>
module attributes {stable_mosaic.version = 11 : i64} {
  func.func @_si_depth_kernel(%arg0: i32, %arg1: i32, %arg2: memref<1x8x128xf32, #tpu.memory_space<vmem>>, %arg3: memref<1x8x128xf32, #tpu.memory_space<vmem>>, %arg4: memref<1x1x1xf32, #tpu.memory_space<vmem>>, %arg5: memref<8x128xf32, #tpu.memory_space<vmem>>, %arg6: memref<8x128xf32, #tpu.memory_space<vmem>>) attributes {dimension_semantics = [#tpu.dimension_semantics<parallel>, #tpu.dimension_semantics<arbitrary>], iteration_bounds = array<i64: 2, 1>, scalar_prefetch = 0 : i64, scratch_operands = 2 : i64, tpu.core_type = #tpu.core_type<tc>, window_params = [{transform_indices = @transform_0, window_bounds = array<i64: 1, 8, 128>}, {transform_indices = @transform_1, window_bounds = array<i64: 1, 8, 128>}, {transform_indices = @transform_2, window_bounds = array<i64: 1, 1, 1>}]} {
    %c0_i32 = arith.constant 0 : i32
    %0 = arith.cmpi eq, %arg1, %c0_i32 : i32
    %1 = arith.extui %0 : i1 to i32
    %c0_i32_0 = arith.constant 0 : i32
    %2 = arith.cmpi ne, %1, %c0_i32_0 : i32
    scf.if %2 {
      %cst_17 = arith.constant 0.000000e+00 : f32
      %23 = vector.broadcast %cst_17 : f32 to vector<8x128xf32>
      %c0_18 = arith.constant 0 : index
      %c0_19 = arith.constant 0 : index
      %24 = vector.load %arg5[%c0_18, %c0_19] : memref<8x128xf32, #tpu.memory_space<vmem>>, vector<8x128xf32>
      tpu.vector_store %arg5[%c0_18, %c0_19], %23 {strides = array<i32>} : memref<8x128xf32, #tpu.memory_space<vmem>>, vector<8x128xf32>,
      %cst_20 = arith.constant 0.000000e+00 : f32
      %25 = vector.broadcast %cst_20 : f32 to vector<8x128xf32>
      %c0_21 = arith.constant 0 : index
      %c0_22 = arith.constant 0 : index
      %26 = vector.load %arg6[%c0_21, %c0_22] : memref<8x128xf32, #tpu.memory_space<vmem>>, vector<8x128xf32>
      tpu.vector_store %arg6[%c0_21, %c0_22], %25 {strides = array<i32>} : memref<8x128xf32, #tpu.memory_space<vmem>>, vector<8x128xf32>,
    } else {
    }
    %c0 = arith.constant 0 : index
    %c0_1 = arith.constant 0 : index
    %c0_2 = arith.constant 0 : index
    %3 = vector.load %arg2[%c0, %c0_1, %c0_2] : memref<1x8x128xf32, #tpu.memory_space<vmem>>, vector<1x8x128xf32>
    %4 = vector.shape_cast %3 : vector<1x8x128xf32> to vector<8x128xf32>
    %c0_3 = arith.constant 0 : index
    %c0_4 = arith.constant 0 : index
    %c0_5 = arith.constant 0 : index
    %5 = vector.load %arg3[%c0_3, %c0_4, %c0_5] : memref<1x8x128xf32, #tpu.memory_space<vmem>>, vector<1x8x128xf32>
    %6 = vector.shape_cast %5 : vector<1x8x128xf32> to vector<8x128xf32>
    %7 = math.log %6 : vector<8x128xf32>
    %8 = arith.subf %4, %7 : vector<8x128xf32>
    %9 = arith.mulf %8, %8 : vector<8x128xf32>
    %c0_6 = arith.constant 0 : index
    %c0_7 = arith.constant 0 : index
    %10 = vector.load %arg5[%c0_6, %c0_7] : memref<8x128xf32, #tpu.memory_space<vmem>>, vector<8x128xf32>
    %11 = vector.shape_cast %8 : vector<8x128xf32> to vector<1x8x128xf32>
    %cst = arith.constant dense<0.000000e+00> : vector<8x128xf32>
    %12 = vector.multi_reduction <add>, %11, %cst [0] : vector<1x8x128xf32> to vector<8x128xf32>
    %13 = arith.addf %10, %12 : vector<8x128xf32>
    %c0_8 = arith.constant 0 : index
    %c0_9 = arith.constant 0 : index
    %14 = vector.load %arg5[%c0_8, %c0_9] : memref<8x128xf32, #tpu.memory_space<vmem>>, vector<8x128xf32>
    tpu.vector_store %arg5[%c0_8, %c0_9], %13 {strides = array<i32>} : memref<8x128xf32, #tpu.memory_space<vmem>>, vector<8x128xf32>,
    %c0_10 = arith.constant 0 : index
    %c0_11 = arith.constant 0 : index
    %15 = vector.load %arg6[%c0_10, %c0_11] : memref<8x128xf32, #tpu.memory_space<vmem>>, vector<8x128xf32>
    %16 = vector.shape_cast %9 : vector<8x128xf32> to vector<1x8x128xf32>
    %cst_12 = arith.constant dense<0.000000e+00> : vector<8x128xf32>
    %17 = vector.multi_reduction <add>, %16, %cst_12 [0] : vector<1x8x128xf32> to vector<8x128xf32>
    %18 = arith.addf %15, %17 : vector<8x128xf32>
    %c0_13 = arith.constant 0 : index
    %c0_14 = arith.constant 0 : index
    %19 = vector.load %arg6[%c0_13, %c0_14] : memref<8x128xf32, #tpu.memory_space<vmem>>, vector<8x128xf32>
    tpu.vector_store %arg6[%c0_13, %c0_14], %18 {strides = array<i32>} : memref<8x128xf32, #tpu.memory_space<vmem>>, vector<8x128xf32>,
    %c0_i32_15 = arith.constant 0 : i32
    %20 = arith.cmpi eq, %arg1, %c0_i32_15 : i32
    %21 = arith.extui %20 : i1 to i32
    %c0_i32_16 = arith.constant 0 : i32
    %22 = arith.cmpi ne, %21, %c0_i32_16 : i32
    scf.if %22 {
      %c0_17 = arith.constant 0 : index
      %c0_18 = arith.constant 0 : index
      %23 = vector.load %arg5[%c0_17, %c0_18] : memref<8x128xf32, #tpu.memory_space<vmem>>, vector<8x128xf32>
      %cst_19 = arith.constant dense<0.000000e+00> : vector<128xf32>
      %24 = vector.multi_reduction <add>, %23, %cst_19 [0] : vector<8x128xf32> to vector<128xf32>
      %25 = vector.shape_cast %24 : vector<128xf32> to vector<1x128xf32>
      %cst_20 = arith.constant dense<0.000000e+00> : vector<1xf32>
      %26 = vector.multi_reduction <add>, %25, %cst_20 [1] : vector<1x128xf32> to vector<1xf32>
      %27 = vector.shape_cast %26 : vector<1xf32> to vector<1x1xf32>
      %c0_21 = arith.constant 0 : index
      %c0_22 = arith.constant 0 : index
      %28 = vector.load %arg6[%c0_21, %c0_22] : memref<8x128xf32, #tpu.memory_space<vmem>>, vector<8x128xf32>
      %cst_23 = arith.constant dense<0.000000e+00> : vector<128xf32>
      %29 = vector.multi_reduction <add>, %28, %cst_23 [0] : vector<8x128xf32> to vector<128xf32>
      %30 = vector.shape_cast %29 : vector<128xf32> to vector<1x128xf32>
      %cst_24 = arith.constant dense<0.000000e+00> : vector<1xf32>
      %31 = vector.multi_reduction <add>, %30, %cst_24 [1] : vector<1x128xf32> to vector<1xf32>
      %32 = vector.shape_cast %31 : vector<1xf32> to vector<1x1xf32>
      %cst_25 = arith.constant 9.765625E-4 : f32
      %33 = vector.broadcast %cst_25 : f32 to vector<1x1xf32>
      %34 = arith.mulf %32, %33 : vector<1x1xf32>
      %cst_26 = arith.constant 9.765625E-4 : f32
      %35 = vector.broadcast %cst_26 : f32 to vector<1x1xf32>
      %36 = arith.mulf %27, %35 : vector<1x1xf32>
      %cst_27 = arith.constant 9.765625E-4 : f32
      %37 = vector.broadcast %cst_27 : f32 to vector<1x1xf32>
      %38 = arith.mulf %27, %37 : vector<1x1xf32>
      %39 = arith.mulf %36, %38 : vector<1x1xf32>
      %cst_28 = arith.constant 5.000000e-01 : f32
      %40 = vector.broadcast %cst_28 : f32 to vector<1x1xf32>
      %41 = arith.mulf %40, %39 : vector<1x1xf32>
      %42 = arith.subf %34, %41 : vector<1x1xf32>
      %43 = vector.shape_cast %42 : vector<1x1xf32> to vector<1x1x1xf32>
      %c0_29 = arith.constant 0 : index
      %c0_30 = arith.constant 0 : index
      %c0_31 = arith.constant 0 : index
      %44 = vector.load %arg4[%c0_29, %c0_30, %c0_31] : memref<1x1x1xf32, #tpu.memory_space<vmem>>, vector<1x1x1xf32>
      tpu.vector_store %arg4[%c0_29, %c0_30, %c0_31], %43 {strides = array<i32>} : memref<1x1x1xf32, #tpu.memory_space<vmem>>, vector<1x1x1xf32>,
    } else {
    }
    return
  }
  func.func @transform_0(%arg0: i32, %arg1: i32) -> (i32, i32, i32) {
    %c0_i32 = arith.constant 0 : i32
    %c0_i32_0 = arith.constant 0 : i32
    return %arg0, %arg1, %c0_i32 : i32, i32, i32
  }
  func.func @transform_1(%arg0: i32, %arg1: i32) -> (i32, i32, i32) {
    %c0_i32 = arith.constant 0 : i32
    %c0_i32_0 = arith.constant 0 : i32
    return %arg0, %arg1, %c0_i32 : i32, i32, i32
  }
  func.func @transform_2(%arg0: i32, %arg1: i32) -> (i32, i32, i32) {
    %c0_i32 = arith.constant 0 : i32
    %c0_i32_0 = arith.constant 0 : i32
    %c0_i32_1 = arith.constant 0 : i32
    return %arg0, %c0_i32, %c0_i32_0 : i32, i32, i32
  }
}

</mosaic_0001>

<llo_original>
// kernel: tpu_custom_call.1
$region0: #{tpu_custom_call.1}
  #allocation0 [shape = 'u32[]', space=smem, size = 0x4, offset = 0x4, fixed_abs, tag = 'smem constant byte address 0x4 - core index']
  #allocation1 [shape = 'u32[144,128]{1,0:T(1,128)}', space=vmem, size = 0x12000, scoped, tag = 'internal scratch']
  #allocation2 [shape = 'f32[8,128]{1,0:T(8,128)}', space=vmem, size = 0x1000, scoped, tag = 'scratch operand']
  #allocation3 [shape = 'f32[8,128]{1,0:T(8,128)}', space=vmem, size = 0x1000, scoped, tag = 'scratch operand']
  %s0 = inlined_call_operand.hbm [shape: f32[2,8,128], index: 0, kind: input, shape index: {}]
  %s1 = inlined_call_operand.hbm [shape: f32[2,8,128], index: 1, kind: input, shape index: {}]
  %s2 = inlined_call_operand.vmem [shape: f32[2,1,1], index: 2, kind: output, shape index: {}]
  %s3 = sld [smem:[#allocation0]]
  $region57: #{tpu_custom_call.1} parent=0
    _
  %s5 = ssub.s32 1, %s3
  %s6 = scalar_select 0, %s5, %s3
  $region1: #{tpu_custom_call.1} parent=0
    #allocation4 [shape = 'u8[8192]{0}', space=vmem, size = 0x2000, scoped, tag = 'input window, operand 0']
    #allocation5 [shape = 's32[2]{0}', space=sflag, size = 0x8, scoped, tag = 'scoped memory for tpu_custom_call.1']
    #allocation6 [shape = 'u8[8192]{0}', space=vmem, size = 0x2000, scoped, tag = 'input window, operand 1']
    #allocation7 [shape = 's32[2]{0}', space=sflag, size = 0x8, scoped, tag = 'scoped memory for tpu_custom_call.1']
    %7 = vsyncpa [#allocation5], 0
    %s8 = scalar_lea.sflag [#allocation5], 1
    %9 = vsyncpa %s8, 0
    %10 = vsyncpa [#allocation7], 0
    %s11 = scalar_lea.sflag [#allocation7], 1
    %12 = vsyncpa %s11, 0
    loop: start=0, step=1, limit=4
    $region2: #{tpu_custom_call.1} parent=1 // loop_pre_header
      _
    $region3: #{tpu_custom_call.1} parent=1 // loop_header
      %s14 = sphi 0, %s18
      %p15 = scmp.ge.s32.totalorder %s14, 4
      %s21 = sphi 0, %s33
      %s22 = sphi 0, %s29
      %s23 = sphi 0, %s21
      %s24 = sphi 0, %s22
      %s25 = sphi 0, %s23
      %s26 = sphi 0, %s24
      %s38 = sphi 0, %s40
      %s41 = sphi 0, %s38
      %s42 = sphi 0, %s41
      %s58 = sphi 0, %s42
      %s66 = sphi 0, %s68
      %s69 = sphi 0, %s66
      %s70 = sphi 0, %s69
      %s86 = sphi 0, %s70
      %s92 = sphi 0, %s94
      %s95 = sphi 0, %s92
      %s96 = sphi 0, %s95
      %s112 = sphi 0, %s96
    $region4: #{tpu_custom_call.1} parent=1 // loop_header_branch
      %17 = sbr.rel (%p15) target = $region8
    $region5: #{tpu_custom_call.1} parent=1 // loop_body
      %s19 = ssub.s32 %s14, 1
      %s20 = ssub.s32 %s14, 2
      %s27 = sadd.s32 1, %s22
      %p28 = scmp.ge.s32.totalorder %s27, 1
      %s29 = scalar_select %p28, 0, %s27
      %s30 = sadd.s32 1, %s21
      %s31 = scalar_select %p28, %s30, %s21
      %p32 = scmp.ge.s32.totalorder %s31, 2
      %s33 = scalar_select %p32, 0, %s31
      %s34 = ssub.s32 %s21, %s33
      %s35 = ssub.s32 %s22, %s29
      %s36 = sor.u32 %s34, %s35
      %p37 = scmp.eq.s32.totalorder %s36, 0
      %s39 = sadd.s32 %s38, 1
      %s40 = scalar_select %p37, %s38, %s39
      %p43 = pneg %p37
      %p44 = scmp.eq.s32.totalorder %s14, 1
      %p45 = por %p43, %p44
      %p46 = scmp.ne.s32.totalorder %s38, %s41
      %p47 = scmp.eq.s32.totalorder %s14, 0
      %p48 = por %p46, %p47
      %p49 = scmp.ne.s32.totalorder %s38, %s41
      %p50 = scmp.eq.s32.totalorder %s19, 1
      %p51 = por %p49, %p50
      %p52 = scmp.ne.s32.totalorder %s41, %s42
      %p53 = scmp.eq.s32.totalorder %s19, 0
      %p54 = por %p52, %p53
      %p55 = scmp.ne.s32.totalorder %s41, %s42
      %p56 = scmp.eq.s32.totalorder %s20, 1
      %p57 = por %p55, %p56
      %p59 = scmp.ne.s32.totalorder %s42, %s58
      %p60 = scmp.eq.s32.totalorder %s20, 0
      %p61 = por %p59, %p60
      %s62 = ssub.s32 %s21, %s33
      %s63 = ssub.s32 %s22, %s29
      %s64 = sor.u32 %s62, %s63
      %p65 = scmp.eq.s32.totalorder %s64, 0
      %s67 = sadd.s32 %s66, 1
      %s68 = scalar_select %p65, %s66, %s67
      %p71 = pneg %p65
      %p72 = scmp.eq.s32.totalorder %s14, 1
      %p73 = por %p71, %p72
      %p74 = scmp.ne.s32.totalorder %s66, %s69
      %p75 = scmp.eq.s32.totalorder %s14, 0
      %p76 = por %p74, %p75
      %p77 = scmp.ne.s32.totalorder %s66, %s69
      %p78 = scmp.eq.s32.totalorder %s19, 1
      %p79 = por %p77, %p78
      %p80 = scmp.ne.s32.totalorder %s69, %s70
      %p81 = scmp.eq.s32.totalorder %s19, 0
      %p82 = por %p80, %p81
      %p83 = scmp.ne.s32.totalorder %s69, %s70
      %p84 = scmp.eq.s32.totalorder %s20, 1
      %p85 = por %p83, %p84
      %p87 = scmp.ne.s32.totalorder %s70, %s86
      %p88 = scmp.eq.s32.totalorder %s20, 0
      %p89 = por %p87, %p88
      %s90 = ssub.s32 %s21, %s33
      %p91 = scmp.eq.s32.totalorder %s90, 0
      %s93 = sadd.s32 %s92, 1
      %s94 = scalar_select %p91, %s92, %s93
      %p97 = pneg %p91
      %p98 = scmp.eq.s32.totalorder %s14, 1
      %p99 = por %p97, %p98
      %p100 = scmp.ne.s32.totalorder %s92, %s95
      %p101 = scmp.eq.s32.totalorder %s14, 0
      %p102 = por %p100, %p101
      %p103 = scmp.ne.s32.totalorder %s92, %s95
      %p104 = scmp.eq.s32.totalorder %s19, 1
      %p105 = por %p103, %p104
      %p106 = scmp.ne.s32.totalorder %s95, %s96
      %p107 = scmp.eq.s32.totalorder %s19, 0
      %p108 = por %p106, %p107
      %p109 = scmp.ne.s32.totalorder %s95, %s96
      %p110 = scmp.eq.s32.totalorder %s20, 1
      %p111 = por %p109, %p110
      %p113 = scmp.ne.s32.totalorder %s96, %s112
      %p114 = scmp.eq.s32.totalorder %s20, 0
      %p115 = por %p113, %p114
      %p116 = scmp.le.s32.totalorder 1, %s14
      %p117 = scmp.lt.s32.totalorder %s14, 3
      %p118 = pnand %p116, %p117
      %p119 = pneg %p118
      // Predicated region
      $region9: #{tpu_custom_call.1} parent=5 // pred_check
        _
      $region10: #{tpu_custom_call.1} parent=5 // pred_check_branch
        %121 = sbr.rel (%p118) target = $region12
      $region11: #{tpu_custom_call.1} parent=5 // pred_region
        %s122 = ssub.s32 %s14, 1
      $region12: #{tpu_custom_call.1} parent=5 // pred_fallthru
        _
      %p123 = scmp.lt.s32.totalorder %s14, 2
      // Predicated region
      $region13: #{tpu_custom_call.1} parent=5 // pred_check
        %p124 = pneg %p123
      $region14: #{tpu_custom_call.1} parent=5 // pred_check_branch
        %126 = sbr.rel (%p124) target = $region16
      $region15: #{tpu_custom_call.1} parent=5 // pred_region
        // Predicated region
        $region17: #{tpu_custom_call.1} parent=15 // pred_check
          %p127 = pneg %p48
        $region18: #{tpu_custom_call.1} parent=15 // pred_check_branch
          %129 = sbr.rel (%p127) target = $region20
        $region19: #{tpu_custom_call.1} parent=15 // pred_region
          %s130 = sand.u32 %s38, 1
          %s131 = scalar_lea.sflag [#allocation5], %s130
          %s132 = sand.u32 %s38, 1
          %s133 = smul.addr %s132, 8
          %s134 = scalar_lea.vmem [#allocation4], %s133
          %s136 = ssub.s32 128, 128
          %137 = vsyncadd %s131, %s136
          %s138 = sadd.s32 %s22, %s21
          %s139 = smul.addr %s138, 128
          %s140 = scalar_lea.hbm %s0, %s139
          %s142 = sshll.u32 %s134, 4
          %s143 = int_to_ptr.vmem [resolvable:$true] %s142
          %145 = dma.hbm_to_vmem [thread:$0]  %s140, 128, %s143, %s131
        $region20: #{tpu_custom_call.1} parent=15 // pred_fallthru
          _
        // Predicated region
        $region21: #{tpu_custom_call.1} parent=15 // pred_check
          %p146 = pneg %p76
        $region22: #{tpu_custom_call.1} parent=15 // pred_check_branch
          %148 = sbr.rel (%p146) target = $region24
        $region23: #{tpu_custom_call.1} parent=15 // pred_region
          %s149 = sand.u32 %s66, 1
          %s150 = scalar_lea.sflag [#allocation7], %s149
          %s151 = sand.u32 %s66, 1
          %s152 = smul.addr %s151, 8
          %s153 = scalar_lea.vmem [#allocation6], %s152
          %s155 = ssub.s32 128, 128
          %156 = vsyncadd %s150, %s155
          %s157 = sadd.s32 %s22, %s21
          %s158 = smul.addr %s157, 128
          %s159 = scalar_lea.hbm %s1, %s158
          %s161 = sshll.u32 %s153, 4
          %s162 = int_to_ptr.vmem [resolvable:$true] %s161
          %164 = dma.hbm_to_vmem [thread:$0]  %s159, 128, %s162, %s150
        $region24: #{tpu_custom_call.1} parent=15 // pred_fallthru
          _
      $region16: #{tpu_custom_call.1} parent=5 // pred_fallthru
        _
      %p165 = scmp.le.s32.totalorder 1, %s14
      %p166 = scmp.lt.s32.totalorder %s14, 3
      %p167 = pnand %p165, %p166
      %p168 = pneg %p167
      // Predicated region
      $region25: #{tpu_custom_call.1} parent=5 // pred_check
        _
      $region26: #{tpu_custom_call.1} parent=5 // pred_check_branch
        %170 = sbr.rel (%p167) target = $region28
      $region27: #{tpu_custom_call.1} parent=5 // pred_region
        %s171 = ssub.s32 %s14, 1
        %s172 = sand.u32 %s41, 1
        %s173 = scalar_lea.sflag [#allocation5], %s172
        %s174 = sand.u32 %s41, 1
        %s175 = smul.addr %s174, 8
        %s176 = scalar_lea.vmem [#allocation4], %s175
        // Predicated region
        $region29: #{tpu_custom_call.1} parent=27 // pred_check
          %p177 = pneg %p54
        $region30: #{tpu_custom_call.1} parent=27 // pred_check_branch
          %179 = sbr.rel (%p177) target = $region32
        $region31: #{tpu_custom_call.1} parent=27 // pred_region
          %180 = dma.done %s173, 128
        $region32: #{tpu_custom_call.1} parent=27 // pred_fallthru
          _
        %s181 = sand.u32 %s69, 1
        %s182 = scalar_lea.sflag [#allocation7], %s181
        %s183 = sand.u32 %s69, 1
        %s184 = smul.addr %s183, 8
        %s185 = scalar_lea.vmem [#allocation6], %s184
        // Predicated region
        $region33: #{tpu_custom_call.1} parent=27 // pred_check
          %p186 = pneg %p82
        $region34: #{tpu_custom_call.1} parent=27 // pred_check_branch
          %188 = sbr.rel (%p186) target = $region36
        $region35: #{tpu_custom_call.1} parent=27 // pred_region
          %189 = dma.done %s182, 128
        $region36: #{tpu_custom_call.1} parent=27 // pred_fallthru
          _
        %s190 = sand.u32 %s41, 1
        %s191 = scalar_lea.sflag [#allocation5], %s190
        %s192 = sand.u32 %s41, 1
        %s193 = smul.addr %s192, 8
        %s194 = scalar_lea.vmem [#allocation4], %s193
        %p195 = pneg %p54
        %p196 = pneg %p51
        %s197 = sand.u32 %s69, 1
        %s198 = scalar_lea.sflag [#allocation7], %s197
        %s199 = sand.u32 %s69, 1
        %s200 = smul.addr %s199, 8
        %s201 = scalar_lea.vmem [#allocation6], %s200
        %p202 = pneg %p82
        %p203 = pneg %p79
        %p204 = pneg %p108
        %p205 = pneg %p105
        %p206 = scmp.lt.s32.totalorder %s23, 1
        %s207 = scalar_select %p206, %s23, 1
        %s208 = scalar_lea.vmem %s2, %s207
        %p209 = scmp.lt.s32.totalorder %s23, 1
        %s210 = scalar_select %p209, %s23, 1
        %s211 = scalar_lea.vmem %s2, %s210
        %p212 = scmp.eq.s32.totalorder %s24, 0
        // Predicated region
        $region37: #{tpu_custom_call.1} parent=27 // pred_check
          %p213 = pneg %p212
        $region38: #{tpu_custom_call.1} parent=27 // pred_check_branch
          %215 = sbr.rel (%p213) target = $region40
        $region39: #{tpu_custom_call.1} parent=27 // pred_region
          %216 = vst [vmem:[#allocation2] sm:$0xff] 0.0
          %217 = vst [vmem:[#allocation3] sm:$0xff] 0.0
        $region40: #{tpu_custom_call.1} parent=27 // pred_fallthru
          _
        %v218 = vld [vmem:[%s176] sm:$0xff]
        %v219 = vld [vmem:[%s185] sm:$0xff]
        %v220 = vlog2.pop %v219
        %v221 = vmul.f32 %v220, 0.6931472
        %v222 = vsub.f32 %v218, %v221
        %v223 = vmul.f32 %v222, %v222
        %v224 = vld [vmem:[#allocation2] sm:$0xff]
        %v225 = vadd.f32 %v222, 0.0
        %v226 = vadd.f32 %v224, %v225
        %227 = vst [vmem:[#allocation2] sm:$0xff] %v226
        %v228 = vld [vmem:[#allocation3] sm:$0xff]
        %v229 = vadd.f32 %v223, 0.0
        %v230 = vadd.f32 %v228, %v229
        %231 = vst [vmem:[#allocation3] sm:$0xff] %v230
        // Predicated region
        $region41: #{tpu_custom_call.1} parent=27 // pred_check
          %p232 = pneg %p212
        $region42: #{tpu_custom_call.1} parent=27 // pred_check_branch
          %234 = sbr.rel (%p232) target = $region44
        $region43: #{tpu_custom_call.1} parent=27 // pred_region
          %v235 = vld [vmem:[#allocation2] sm:$0xff]
          %v236 = vrot.slane %v235, 4
          %v237 = vadd.f32 %v235, %v236
          %v238 = vrot.slane %v237, 2
          %v239 = vadd.f32 %v237, %v238
          %v240 = vrot.slane %v239, 1
          %v241 = vadd.f32 %v239, %v240
          %242 = vadd.xlane.f32.xlu0 %v241
          %v243 = vpop.xlane.xlu0 %242
          %v244 = vld [vmem:[#allocation3] sm:$0xff]
          %v245 = vrot.slane %v244, 4
          %v246 = vadd.f32 %v244, %v245
          %v247 = vrot.slane %v246, 2
          %v248 = vadd.f32 %v246, %v247
          %v249 = vrot.slane %v248, 1
          %v250 = vadd.f32 %v248, %v249
          %251 = vadd.xlane.f32.xlu0 %v250
          %v252 = vpop.xlane.xlu0 %251
          %v253 = vmul.f32 %v252, 0.0009765625
          %v254 = vmul.f32 %v243, 0.0009765625
          %v255 = vmul.f32 %v254, %v254
          %v256 = vmul.f32 %v255, 0.5
          %v257 = vsub.f32 %v253, %v256
          %vm258 = vcmask 0
          %259 = vst.msk [vmem:[%s211] sm:$0x1] %vm258, %v257
        $region44: #{tpu_custom_call.1} parent=27 // pred_fallthru
          _
        %p260 = scmp.lt.s32.totalorder %s23, 1
        %s261 = scalar_select %p260, %s23, 1
        %s262 = scalar_lea.vmem %s2, %s261
        // Predicated region
        $region45: #{tpu_custom_call.1} parent=27 // pred_check
          %p263 = pneg %p105
        $region46: #{tpu_custom_call.1} parent=27 // pred_check_branch
          %265 = sbr.rel (%p263) target = $region48
        $region47: #{tpu_custom_call.1} parent=27 // pred_region
          _
        $region48: #{tpu_custom_call.1} parent=27 // pred_fallthru
          _
      $region28: #{tpu_custom_call.1} parent=5 // pred_fallthru
        _
      %p266 = scmp.le.s32.totalorder 2, %s14
      // Predicated region
      $region49: #{tpu_custom_call.1} parent=5 // pred_check
        %p267 = pneg %p266
      $region50: #{tpu_custom_call.1} parent=5 // pred_check_branch
        %269 = sbr.rel (%p267) target = $region52
      $region51: #{tpu_custom_call.1} parent=5 // pred_region
        %s270 = ssub.s32 %s14, 2
        // Predicated region
        $region53: #{tpu_custom_call.1} parent=51 // pred_check
          %p271 = pneg %p111
        $region54: #{tpu_custom_call.1} parent=51 // pred_check_branch
          %273 = sbr.rel (%p271) target = $region56
        $region55: #{tpu_custom_call.1} parent=51 // pred_region
          %p274 = scmp.lt.s32.totalorder %s25, 1
          %s275 = scalar_select %p274, %s25, 1
          %s276 = scalar_lea.vmem %s2, %s275
        $region56: #{tpu_custom_call.1} parent=51 // pred_fallthru
          _
      $region52: #{tpu_custom_call.1} parent=5 // pred_fallthru
        _
    $region6: #{tpu_custom_call.1} parent=1 // loop_footer
      %s18 = sadd.s32 1, %s14
    $region7: #{tpu_custom_call.1} parent=1 // loop_footer_branch
      %13 = sbr.rel target = $region3
    $region8: #{tpu_custom_call.1} parent=1 // loop_exit
      _
    %277 = vsyncpa [#allocation5], 1
    %s278 = scalar_lea.sflag [#allocation5], 1
    %279 = vsyncpa %s278, 1
    %280 = vsyncpa [#allocation7], 1
    %s281 = scalar_lea.sflag [#allocation7], 1
    %282 = vsyncpa %s281, 1

</llo_original>
